<compile_context>
chip_gen: v5e
topology: v5e:2x2
jax: 0.10.0
libtpu: 0.0.40
codegen_flags: <defaults>
</compile_context>

<pallas_src>
import jax
import jax.numpy as jnp
from jax.experimental import pallas as pl
from jax.experimental.pallas import tpu as pltpu


def _abs_pos_emb_kernel(q_ref, embt_ref, o_ref):
    # q_ref: (TM, D)   embt_ref: (D, J_pad)   o_ref: (TM, J_pad)
    o_ref[...] = jnp.dot(
        q_ref[...], embt_ref[...], preferred_element_type=jnp.float32
    ).astype(o_ref.dtype)


def _round_up(x, m):
    return ((x + m - 1) // m) * m


def _padded_vmem_bytes(rows, cols, itemsize):
    """Bytes one (rows, cols) block really occupies in VMEM after
    sublane/lane padding (sublane multiple depends on dtype packing)."""
    sublane = 8 * max(1, 4 // itemsize)  # f32 -> 8, bf16 -> 16, int8 -> 32
    return _round_up(rows, sublane) * _round_up(cols, 128) * itemsize


def _vmem_capacity_bytes():
    try:
        cap = getattr(pltpu.get_tpu_info(), "vmem_capacity_bytes", None)
        if cap:
            return int(cap)
    except Exception:
        pass
    return 64 << 20  # conservative default: v7x per-TensorCore VMEM


def _choose_tm(M, D, J_pad, q_isz, out_isz, vmem_budget_bytes):
    """Pick an M-tile.  The kernel is HBM-bound, so throughput saturates
    around 512-row tiles; larger tiles only collapse the grid and expose the
    q-load / out-writeback DMAs.  Prefer >=4 grid steps (>=2 per v7x
    TensorCore) and an even step count so both cores get equal work."""
    sublane = 8 * max(1, 4 // q_isz)
    steps = lambda t: -(-M // t)

    candidates = []
    tm = 512  # cap: measured saturation point for mem-bound tiles
    while tm >= sublane:
        need = (
            2 * _padded_vmem_bytes(tm, D, q_isz)        # double-buffered q tile
            + 2 * _padded_vmem_bytes(tm, J_pad, out_isz)  # double-buffered out tile
            + 2 * _padded_vmem_bytes(D, J_pad, q_isz)     # emb (default 2 buffers)
        )
        if need <= vmem_budget_bytes:
            candidates.append(tm)
        tm //= 2
    if not candidates:
        candidates = [sublane]

    for ok in (
        lambda t: steps(t) >= 4 and steps(t) % 2 == 0,
        lambda t: steps(t) >= 4,
        lambda t: steps(t) % 2 == 0,
        lambda t: True,
    ):
        fitting = [t for t in candidates if ok(t)]
        if fitting:
            return max(fitting)
    return candidates[-1]


def abs_pos_emb(q, height, width):
    """q: (B, heads, I, D); height: (H, D); width: (W, D) -> (B, heads, I, H*W)."""
    B, NH, I, D = q.shape
    H = height.shape[0]
    W = width.shape[0]
    J = H * W
    M = B * NH * I
    out_dtype = q.dtype

    # emb[j, d] with j = hi*W + wi (matches torch's row-major .view(-1, D)),
    # transposed once to (D, J) so the kernel RHS is already in (K, N) layout.
    emb_t = (height[:, None, :] + width[None, :, :]).reshape(J, D).T
    # Cast RHS to q's dtype: keeps the bf16 MXU fast path and halves RHS DMA
    # when q is bf16 (small precision loss in the embedding term; accumulation
    # remains f32 via preferred_element_type).
    emb_t = emb_t.astype(q.dtype)

    # Lane-dense output: pad J to a multiple of 128 with zero columns so the
    # output stores are unmasked full vst; padding is sliced off afterwards.
    J_pad = _round_up(J, 128)
    if J_pad != J:
        emb_t = jnp.pad(emb_t, ((0, 0), (0, J_pad - J)))

    q_isz = jnp.dtype(q.dtype).itemsize
    out_isz = jnp.dtype(out_dtype).itemsize

    vmem_cap = _vmem_capacity_bytes()
    vmem_limit = min((vmem_cap * 3) // 4, 96 << 20)  # headroom for compiler scratch
    vmem_budget = (vmem_limit * 3) // 4              # headroom within the limit

    tm = _choose_tm(M, D, J_pad, q_isz, out_isz, vmem_budget)
    num_steps = -(-M // tm)
    M_pad = num_steps * tm

    q_flat = q.reshape(M, D)
    if M_pad != M:
        q_flat = jnp.pad(q_flat, ((0, M_pad - M), (0, 0)))

    cost = pl.CostEstimate(
        flops=2 * M * D * J,
        transcendentals=0,
        bytes_accessed=M * D * q_isz + J * D * q_isz + M * J * out_isz,
    )

    # TODO(synk): fusing this matmul into the downstream attention-logits
    # kernel would remove the (B, heads, I, J) HBM round-trip entirely; the
    # grid-invariant emb_t operand could also be single-buffered
    # (pipeline_mode=pl.Buffered(1)) to reclaim one VMEM buffer at large J.
    out = pl.pallas_call(
        _abs_pos_emb_kernel,
        out_shape=jax.ShapeDtypeStruct((M_pad, J_pad), out_dtype),
        grid_spec=pltpu.PrefetchScalarGridSpec(
            num_scalar_prefetch=0,
            grid=(num_steps,),
            in_specs=[
                pl.BlockSpec((tm, D), lambda m: (m, 0)),
                pl.BlockSpec((D, J_pad), lambda m: (0, 0)),
            ],
            out_specs=pl.BlockSpec((tm, J_pad), lambda m: (m, 0)),
        ),
        compiler_params=pltpu.CompilerParams(
            dimension_semantics=("parallel",),
            vmem_limit_bytes=vmem_limit,
        ),
        cost_estimate=cost,
    )(q_flat, emb_t)

    return out[:M, :J].reshape(B, NH, I, J)


if __name__ == "__main__":
    key = jax.random.PRNGKey(0)
    k_q, k_h, k_w = jax.random.split(key, 3)

    # Small shapes: fmap_size = 8 (H = W = 8), dim_head = 32,
    # batch = 2, heads = 4, query length I = H*W = 64.
    fmap = 8
    dim_head = 32
    B, NH = 2, 4
    H = W = fmap
    I = H * W
    scale = dim_head ** (-0.5)

    # Deterministic "parameters" (matching nn.Parameter(randn(...) * scale)).
    height = jax.random.normal(k_h, (H, dim_head), dtype=jnp.float32) * scale
    width = jax.random.normal(k_w, (W, dim_head), dtype=jnp.float32) * scale
    q = jax.random.normal(k_q, (B, NH, I, dim_head), dtype=jnp.float32)

    logits = abs_pos_emb(q, height, width)
    jax.block_until_ready(logits)

    # Reference check in plain JAX (same math as the PyTorch forward).
    emb_ref = (height[:, None, :] + width[None, :, :]).reshape(-1, dim_head)
    ref = jnp.einsum("bhid,jd->bhij", q, emb_ref)
    assert logits.shape == (B, NH, I, H * W)
    assert jnp.allclose(logits, ref, atol=1e-4, rtol=1e-4)

    print("KERNEL_OK")
</pallas_src>

<mosaic_0001>
module attributes {stable_mosaic.version = 11 : i64} {
  func.func @_abs_pos_emb_kernel(%arg0: i32, %arg1: memref<128x32xf32, #tpu.memory_space<vmem>>, %arg2: memref<32x128xf32, #tpu.memory_space<vmem>>, %arg3: memref<128x128xf32, #tpu.memory_space<vmem>>) attributes {dimension_semantics = [#tpu.dimension_semantics<parallel>], iteration_bounds = array<i64: 4>, scalar_prefetch = 0 : i64, scratch_operands = 0 : i64, tpu.core_type = #tpu.core_type<tc>, window_params = [{transform_indices = @transform_0, window_bounds = array<i64: 128, 32>}, {pipeline_mode = #tpu.pipeline_mode<synchronous>, transform_indices = @transform_1, window_bounds = array<i64: 32, 128>}, {transform_indices = @transform_2, window_bounds = array<i64: 128, 128>}]} {
    %c0 = arith.constant 0 : index
    %c0_0 = arith.constant 0 : index
    %0 = vector.load %arg1[%c0, %c0_0] : memref<128x32xf32, #tpu.memory_space<vmem>>, vector<128x32xf32>
    %c0_1 = arith.constant 0 : index
    %c0_2 = arith.constant 0 : index
    %1 = vector.load %arg2[%c0_1, %c0_2] : memref<32x128xf32, #tpu.memory_space<vmem>>, vector<32x128xf32>
    %cst = arith.constant dense<0.000000e+00> : vector<128x128xf32>
    %2 = tpu.matmul %0, %1, %cst {dimension_numbers = #tpu.dot_dimension_numbers<[1], [0], [0], [1], [0, 0, 1, 1], [], []>} : vector<128x32xf32>, vector<32x128xf32>, vector<128x128xf32> -> vector<128x128xf32>
    %c0_3 = arith.constant 0 : index
    %c0_4 = arith.constant 0 : index
    %3 = vector.load %arg3[%c0_3, %c0_4] : memref<128x128xf32, #tpu.memory_space<vmem>>, vector<128x128xf32>
    tpu.vector_store %arg3[%c0_3, %c0_4], %2 {strides = array<i32>} : memref<128x128xf32, #tpu.memory_space<vmem>>, vector<128x128xf32>,
    return
  }
  func.func @transform_0(%arg0: i32) -> (i32, i32) {
    %c0_i32 = arith.constant 0 : i32
    %c0_i32_0 = arith.constant 0 : i32
    return %arg0, %c0_i32 : i32, i32
  }
  func.func @transform_1(%arg0: i32) -> (i32, i32) {
    %c0_i32 = arith.constant 0 : i32
    %c0_i32_0 = arith.constant 0 : i32
    %c0_i32_1 = arith.constant 0 : i32
    return %c0_i32, %c0_i32_0 : i32, i32
  }
  func.func @transform_2(%arg0: i32) -> (i32, i32) {
    %c0_i32 = arith.constant 0 : i32
    %c0_i32_0 = arith.constant 0 : i32
    return %arg0, %c0_i32 : i32, i32
  }
}

</mosaic_0001>

<llo_original>
// kernel: tpu_custom_call.1
$region0: #{tpu_custom_call.1}
  #allocation0 [shape = 'u32[]', space=smem, size = 0x4, offset = 0x4, fixed_abs, tag = 'smem constant byte address 0x4 - core index']
  #allocation1 [shape = 'u32[72,128]{1,0:T(1,128)}', space=vmem, size = 0x9000, scoped, tag = 'internal scratch']
  %s0 = inlined_call_operand.vmem [shape: f32[512,32], index: 0, kind: input, shape index: {}]
  %s1 = inlined_call_operand.vmem [shape: f32[32,128], index: 1, kind: input, shape index: {}]
  %s2 = inlined_call_operand.hbm [shape: f32[512,128], index: 2, kind: output, shape index: {}]
  %s3 = sld [smem:[#allocation0]]
  $region41: #{tpu_custom_call.1} parent=0
    _
  %s5 = ssub.s32 1, %s3
  %s6 = scalar_select 0, %s5, %s3
  $region1: #{tpu_custom_call.1} parent=0
    #allocation2 [shape = 'u8[131072]{0}', space=vmem, size = 0x20000, scoped, tag = 'output window, operand 0']
    #allocation3 [shape = 's32[2]{0}', space=sflag, size = 0x8, scoped, tag = 'scoped memory for tpu_custom_call.1']
    %7 = vsyncpa [#allocation3], 0
    %s8 = scalar_lea.sflag [#allocation3], 1
    %9 = vsyncpa %s8, 0
    loop: start=0, step=1, limit=6
    $region2: #{tpu_custom_call.1} parent=1 // loop_pre_header
      _
    $region3: #{tpu_custom_call.1} parent=1 // loop_header
      %s11 = sphi 0, %s15
      %p12 = scmp.ge.s32.totalorder %s11, 6
      %s21 = sphi 0, %s23
      %s24 = sphi 0, %s21
      %s25 = sphi 0, %s24
      %s41 = sphi 0, %s25
      %s45 = sphi 0, %s45
      %s47 = sphi 0, %s45
      %s48 = sphi 0, %s47
      %s62 = sphi 0, %s48
      %s68 = sphi 0, %s70
      %s71 = sphi 0, %s68
      %s72 = sphi 0, %s71
      %s88 = sphi 0, %s72
    $region4: #{tpu_custom_call.1} parent=1 // loop_header_branch
      %14 = sbr.rel (%p12) target = $region8
    $region5: #{tpu_custom_call.1} parent=1 // loop_body
      %s16 = ssub.s32 %s11, 1
      %s17 = ssub.s32 %s11, 2
      %s18 = sadd.s32 %s11, 1
      %s19 = ssub.s32 %s11, %s18
      %p20 = scmp.eq.s32.totalorder %s19, 0
      %s22 = sadd.s32 %s21, 1
      %s23 = scalar_select %p20, %s21, %s22
      %p26 = pneg %p20
      %p27 = scmp.eq.s32.totalorder %s11, 3
      %p28 = por %p26, %p27
      %p29 = scmp.ne.s32.totalorder %s21, %s24
      %p30 = scmp.eq.s32.totalorder %s11, 0
      %p31 = por %p29, %p30
      %p32 = scmp.ne.s32.totalorder %s21, %s24
      %p33 = scmp.eq.s32.totalorder %s16, 3
      %p34 = por %p32, %p33
      %p35 = scmp.ne.s32.totalorder %s24, %s25
      %p36 = scmp.eq.s32.totalorder %s16, 0
      %p37 = por %p35, %p36
      %p38 = scmp.ne.s32.totalorder %s24, %s25
      %p39 = scmp.eq.s32.totalorder %s17, 3
      %p40 = por %p38, %p39
      %p42 = scmp.ne.s32.totalorder %s25, %s41
      %p43 = scmp.eq.s32.totalorder %s17, 0
      %p44 = por %p42, %p43
      %s46 = sadd.s32 %s45, 1
      %p49 = scmp.eq.s32.totalorder %s11, 3
      %p50 = scmp.ne.s32.totalorder %s45, %s47
      %p51 = scmp.eq.s32.totalorder %s11, 0
      %p52 = por %p50, %p51
      %p53 = scmp.ne.s32.totalorder %s45, %s47
      %p54 = scmp.eq.s32.totalorder %s16, 3
      %p55 = por %p53, %p54
      %p56 = scmp.ne.s32.totalorder %s47, %s48
      %p57 = scmp.eq.s32.totalorder %s16, 0
      %p58 = por %p56, %p57
      %p59 = scmp.ne.s32.totalorder %s47, %s48
      %p60 = scmp.eq.s32.totalorder %s17, 3
      %p61 = por %p59, %p60
      %p63 = scmp.ne.s32.totalorder %s48, %s62
      %p64 = scmp.eq.s32.totalorder %s17, 0
      %p65 = por %p63, %p64
      %s66 = ssub.s32 %s11, %s18
      %p67 = scmp.eq.s32.totalorder %s66, 0
      %s69 = sadd.s32 %s68, 1
      %s70 = scalar_select %p67, %s68, %s69
      %p73 = pneg %p67
      %p74 = scmp.eq.s32.totalorder %s11, 3
      %p75 = por %p73, %p74
      %p76 = scmp.ne.s32.totalorder %s68, %s71
      %p77 = scmp.eq.s32.totalorder %s11, 0
      %p78 = por %p76, %p77
      %p79 = scmp.ne.s32.totalorder %s68, %s71
      %p80 = scmp.eq.s32.totalorder %s16, 3
      %p81 = por %p79, %p80
      %p82 = scmp.ne.s32.totalorder %s71, %s72
      %p83 = scmp.eq.s32.totalorder %s16, 0
      %p84 = por %p82, %p83
      %p85 = scmp.ne.s32.totalorder %s71, %s72
      %p86 = scmp.eq.s32.totalorder %s17, 3
      %p87 = por %p85, %p86
      %p89 = scmp.ne.s32.totalorder %s72, %s88
      %p90 = scmp.eq.s32.totalorder %s17, 0
      %p91 = por %p89, %p90
      %p92 = scmp.le.s32.totalorder 1, %s11
      %p93 = scmp.lt.s32.totalorder %s11, 5
      %p94 = pnand %p92, %p93
      %p95 = pneg %p94
      // Predicated region
      $region9: #{tpu_custom_call.1} parent=5 // pred_check
        _
      $region10: #{tpu_custom_call.1} parent=5 // pred_check_branch
        %97 = sbr.rel (%p94) target = $region12
      $region11: #{tpu_custom_call.1} parent=5 // pred_region
        %s98 = ssub.s32 %s11, 1
        // Predicated region
        $region13: #{tpu_custom_call.1} parent=11 // pred_check
          %p99 = pneg %p58
        $region14: #{tpu_custom_call.1} parent=11 // pred_check_branch
          %101 = sbr.rel (%p99) target = $region16
        $region15: #{tpu_custom_call.1} parent=11 // pred_region
          _
        $region16: #{tpu_custom_call.1} parent=11 // pred_fallthru
          _
      $region12: #{tpu_custom_call.1} parent=5 // pred_fallthru
        _
      %p102 = scmp.lt.s32.totalorder %s11, 4
      // Predicated region
      $region17: #{tpu_custom_call.1} parent=5 // pred_check
        %p103 = pneg %p102
      $region18: #{tpu_custom_call.1} parent=5 // pred_check_branch
        %105 = sbr.rel (%p103) target = $region20
      $region19: #{tpu_custom_call.1} parent=5 // pred_region
        // Predicated region
        $region21: #{tpu_custom_call.1} parent=19 // pred_check
          %p106 = pneg %p31
        $region22: #{tpu_custom_call.1} parent=19 // pred_check_branch
          %108 = sbr.rel (%p106) target = $region24
        $region23: #{tpu_custom_call.1} parent=19 // pred_region
          %s109 = smul.u32 16, %s11
          %p110 = scmp.lt.s32.totalorder %s109, 63
          %s111 = scalar_select %p110, %s109, 63
          %s112 = smul.addr %s111, 8
          %s113 = scalar_lea.vmem %s0, %s112
          %s114 = smul.u32 16, %s11
        $region24: #{tpu_custom_call.1} parent=19 // pred_fallthru
          _
      $region20: #{tpu_custom_call.1} parent=5 // pred_fallthru
        _
      %p115 = scmp.le.s32.totalorder 1, %s11
      %p116 = scmp.lt.s32.totalorder %s11, 5
      %p117 = pnand %p115, %p116
      %p118 = pneg %p117
      // Predicated region
      $region25: #{tpu_custom_call.1} parent=5 // pred_check
        _
      $region26: #{tpu_custom_call.1} parent=5 // pred_check_branch
        %120 = sbr.rel (%p117) target = $region28
      $region27: #{tpu_custom_call.1} parent=5 // pred_region
        %s121 = ssub.s32 %s11, 1
        %s122 = smul.u32 16, %s16
        %p123 = scmp.lt.s32.totalorder %s122, 63
        %s124 = scalar_select %p123, %s122, 63
        %s125 = smul.addr %s124, 8
        %s126 = scalar_lea.vmem %s0, %s125
        %p127 = pneg %p37
        %p128 = pneg %p34
        %p129 = pneg %p58
        %p130 = pneg %p55
        %p131 = pneg %p84
        %p132 = pneg %p81
        %s133 = sand.u32 %s71, 1
        %s134 = scalar_lea.sflag [#allocation3], %s133
        %s135 = sand.u32 %s71, 1
        %s136 = smul.addr %s135, 128
        %s137 = scalar_lea.vmem [#allocation2], %s136
        %s138 = smul.u32 16, %s16
        %p139 = scmp.lt.s32.totalorder %s138, 63
        %s140 = scalar_select %p139, %s138, 63
        %s141 = smul.addr %s140, 8
        %s142 = scalar_lea.vmem %s0, %s141
        %s143 = smul.u32 16, %s16
        %s144 = smul.u32 16, %s16
        %v145 = vld [vmem:[%s142] sm:$0xff]
        %v146 = vld [vmem:[%s142 + $0x8] sm:$0xff]
        %v147 = vld [vmem:[%s142 + $0x10] sm:$0xff]
        %v148 = vld [vmem:[%s142 + $0x18] sm:$0xff]
        %v149 = vld [vmem:[%s142 + $0x20] sm:$0xff]
        %v150 = vld [vmem:[%s142 + $0x28] sm:$0xff]
        %v151 = vld [vmem:[%s142 + $0x30] sm:$0xff]
        %v152 = vld [vmem:[%s142 + $0x38] sm:$0xff]
        %v153 = vld [vmem:[%s142 + $0x40] sm:$0xff]
        %v154 = vld [vmem:[%s142 + $0x48] sm:$0xff]
        %v155 = vld [vmem:[%s142 + $0x50] sm:$0xff]
        %v156 = vld [vmem:[%s142 + $0x58] sm:$0xff]
        %v157 = vld [vmem:[%s142 + $0x60] sm:$0xff]
        %v158 = vld [vmem:[%s142 + $0x68] sm:$0xff]
        %v159 = vld [vmem:[%s142 + $0x70] sm:$0xff]
        %v160 = vld [vmem:[%s142 + $0x78] sm:$0xff]
        %v161 = vld [vmem:[%s1] sm:$0xff]
        %v162 = vld [vmem:[%s1 + $0x8] sm:$0xff]
        %v163 = vld [vmem:[%s1 + $0x10] sm:$0xff]
        %v164 = vld [vmem:[%s1 + $0x18] sm:$0xff]
        %vm165 = vcmask 261120
        %v167 = vsel %vm165, %v145, 0
        %v170 = vsel %vm165, %v146, 0
        %v173 = vsel %vm165, %v147, 0
        %v176 = vsel %vm165, %v148, 0
        %v179 = vsel %vm165, %v149, 0
        %v182 = vsel %vm165, %v150, 0
        %v185 = vsel %vm165, %v151, 0
        %v188 = vsel %vm165, %v152, 0
        %v191 = vsel %vm165, %v153, 0
        %v194 = vsel %vm165, %v154, 0
        %v197 = vsel %vm165, %v155, 0
        %v200 = vsel %vm165, %v156, 0
        %v203 = vsel %vm165, %v157, 0
        %v206 = vsel %vm165, %v158, 0
        %v209 = vsel %vm165, %v159, 0
        %v212 = vsel %vm165, %v160, 0
        %214 = vmatpush.msra.mxu0 0.0
        %215 = vmatpush.msra.mxu0 0.0
        %216 = vmatpush.msra.mxu0 0.0
        %217 = vmatpush.msra.mxu0 0.0
        %218 = vmatpush.msra.mxu0 0.0
        %219 = vmatpush.msra.mxu0 0.0
        %220 = vmatpush.msra.mxu0 0.0
        %221 = vmatpush.msra.mxu0 0.0
        %222 = vmatpush.msra.mxu0 0.0
        %223 = vmatpush.msra.mxu0 0.0
        %224 = vmatpush.msra.mxu0 0.0
        %225 = vmatpush.msra.mxu0 0.0
        %226 = vmatpush.msra.mxu0 %v164
        %227 = vmatpush.msra.mxu0 %v163
        %228 = vmatpush.msra.mxu0 %v162
        %229 = vmatpush.msra.mxu0 %v161
        %230 = vmatmul.f32.gmra.mxu0 %v167
        %v231 = vpop.f32.mrf.mxu0
        %v232 = vadd.f32 0.0, %v231
        %233 = vmatmul.f32.gmra.mxu0 %v170
        %v234 = vpop.f32.mrf.mxu0
        %v235 = vadd.f32 0.0, %v234
        %236 = vmatmul.f32.gmra.mxu0 %v173
        %v237 = vpop.f32.mrf.mxu0
        %v238 = vadd.f32 0.0, %v237
        %239 = vmatmul.f32.gmra.mxu0 %v176
        %v240 = vpop.f32.mrf.mxu0
        %v241 = vadd.f32 0.0, %v240
        %242 = vmatmul.f32.gmra.mxu0 %v179
        %v243 = vpop.f32.mrf.mxu0
        %v244 = vadd.f32 0.0, %v243
        %245 = vmatmul.f32.gmra.mxu0 %v182
        %v246 = vpop.f32.mrf.mxu0
        %v247 = vadd.f32 0.0, %v246
        %248 = vmatmul.f32.gmra.mxu0 %v185
        %v249 = vpop.f32.mrf.mxu0
        %v250 = vadd.f32 0.0, %v249
        %251 = vmatmul.f32.gmra.mxu0 %v188
        %v252 = vpop.f32.mrf.mxu0
        %v253 = vadd.f32 0.0, %v252
        %254 = vmatmul.f32.gmra.mxu0 %v191
        %v255 = vpop.f32.mrf.mxu0
        %v256 = vadd.f32 0.0, %v255
        %257 = vmatmul.f32.gmra.mxu0 %v194
        %v258 = vpop.f32.mrf.mxu0
        %v259 = vadd.f32 0.0, %v258
        %260 = vmatmul.f32.gmra.mxu0 %v197
        %v261 = vpop.f32.mrf.mxu0
        %v262 = vadd.f32 0.0, %v261
        %263 = vmatmul.f32.gmra.mxu0 %v200
        %v264 = vpop.f32.mrf.mxu0
        %v265 = vadd.f32 0.0, %v264
        %266 = vmatmul.f32.gmra.mxu0 %v203
        %v267 = vpop.f32.mrf.mxu0
        %v268 = vadd.f32 0.0, %v267
        %269 = vmatmul.f32.gmra.mxu0 %v206
        %v270 = vpop.f32.mrf.mxu0
        %v271 = vadd.f32 0.0, %v270
        %272 = vmatmul.f32.gmra.mxu0 %v209
        %v273 = vpop.f32.mrf.mxu0
        %v274 = vadd.f32 0.0, %v273
        %275 = vmatmul.f32.gmra.mxu0 %v212
        %v276 = vpop.f32.mrf.mxu0
        %v277 = vadd.f32 0.0, %v276
        %278 = vdwg.mxu0
        %279 = vst [vmem:[%s137] sm:$0xff] %v232
        %280 = vst [vmem:[%s137 + $0x8] sm:$0xff] %v235
        %281 = vst [vmem:[%s137 + $0x10] sm:$0xff] %v238
        %282 = vst [vmem:[%s137 + $0x18] sm:$0xff] %v241
        %283 = vst [vmem:[%s137 + $0x20] sm:$0xff] %v244
        %284 = vst [vmem:[%s137 + $0x28] sm:$0xff] %v247
        %285 = vst [vmem:[%s137 + $0x30] sm:$0xff] %v250
        %286 = vst [vmem:[%s137 + $0x38] sm:$0xff] %v253
        %287 = vst [vmem:[%s137 + $0x40] sm:$0xff] %v256
        %288 = vst [vmem:[%s137 + $0x48] sm:$0xff] %v259
        %289 = vst [vmem:[%s137 + $0x50] sm:$0xff] %v262
        %290 = vst [vmem:[%s137 + $0x58] sm:$0xff] %v265
        %291 = vst [vmem:[%s137 + $0x60] sm:$0xff] %v268
        %292 = vst [vmem:[%s137 + $0x68] sm:$0xff] %v271
        %293 = vst [vmem:[%s137 + $0x70] sm:$0xff] %v274
        %294 = vst [vmem:[%s137 + $0x78] sm:$0xff] %v277
        %s295 = sand.u32 %s71, 1
        %s296 = scalar_lea.sflag [#allocation3], %s295
        %s297 = sand.u32 %s71, 1
        %s298 = smul.addr %s297, 128
        %s299 = scalar_lea.vmem [#allocation2], %s298
        // Predicated region
        $region29: #{tpu_custom_call.1} parent=27 // pred_check
          %p300 = pneg %p81
        $region30: #{tpu_custom_call.1} parent=27 // pred_check_branch
          %302 = sbr.rel (%p300) target = $region32
        $region31: #{tpu_custom_call.1} parent=27 // pred_region
          %s303 = smul.u32 16, %s16
          %305 = vsyncadd %s296, 0
          %s306 = smul.addr %s303, 8
          %s307 = scalar_lea.hbm %s2, %s306
          %s308 = sshll.u32 %s299, 4
          %s309 = int_to_ptr.vmem [resolvable:$true] %s308
          %s310 = sshll.u32 %s307, 4
          %s311 = int_to_ptr.hbm [resolvable:$true] %s310
          %316 = dma.vmem_to_hbm [thread:$0]  %s309, 2048, %s311, %s296, 128, 128, 8
        $region32: #{tpu_custom_call.1} parent=27 // pred_fallthru
          _
      $region28: #{tpu_custom_call.1} parent=5 // pred_fallthru
        _
      %p317 = scmp.le.s32.totalorder 2, %s11
      // Predicated region
      $region33: #{tpu_custom_call.1} parent=5 // pred_check
        %p318 = pneg %p317
      $region34: #{tpu_custom_call.1} parent=5 // pred_check_branch
        %320 = sbr.rel (%p318) target = $region36
      $region35: #{tpu_custom_call.1} parent=5 // pred_region
        %s321 = ssub.s32 %s11, 2
        // Predicated region
        $region37: #{tpu_custom_call.1} parent=35 // pred_check
          %p322 = pneg %p87
        $region38: #{tpu_custom_call.1} parent=35 // pred_check_branch
          %324 = sbr.rel (%p322) target = $region40
        $region39: #{tpu_custom_call.1} parent=35 // pred_region
          %s325 = sand.u32 %s72, 1
          %s326 = scalar_lea.sflag [#allocation3], %s325
          %s327 = sand.u32 %s72, 1
          %s328 = smul.addr %s327, 128
          %s329 = scalar_lea.vmem [#allocation2], %s328
          %331 = dma.done %s326, 2048
        $region40: #{tpu_custom_call.1} parent=35 // pred_fallthru
          _
      $region36: #{tpu_custom_call.1} parent=5 // pred_fallthru
        _
    $region6: #{tpu_custom_call.1} parent=1 // loop_footer
      %s15 = sadd.s32 1, %s11
    $region7: #{tpu_custom_call.1} parent=1 // loop_footer_branch
      %10 = sbr.rel target = $region3
    $region8: #{tpu_custom_call.1} parent=1 // loop_exit
      _
    %332 = vsyncpa [#allocation3], 1
    %s333 = scalar_lea.sflag [#allocation3], 1
    %334 = vsyncpa %s333, 1

</llo_original>
